<compile_context>
chip_gen: v5e
topology: v5e:2x2
jax: 0.10.0
libtpu: 0.0.40
codegen_flags: <defaults>
</compile_context>

<pallas_src>
import functools

import jax
import jax.numpy as jnp
from jax import lax
from jax.experimental import pallas as pl
from jax.experimental.pallas import tpu as pltpu


def _rnn_scan_kernel(x_ref, h0_ref, wxh_ref, wxo_ref, who_ref, apow_ref,
                     bh_ref, bo_ref, out_ref, h_scr,
                     *, tc, dh, dout, n_scan):
    """One grid step == one (batch-tile, chunk-of-tc-timesteps) block.

    x_ref    : (Bt, Tc, Din)      input chunk
    h0_ref   : (Bt, 1, Dh)        initial hidden state (batch tile)
    wxh_ref  : (Din, Dh)          x -> hidden weights
    wxo_ref  : (Din, Dout)        x -> output weights
    who_ref  : (Dh, Dout)         hidden -> output weights
    apow_ref : (L, Dh, Dh)        A^(2^k) with A = hidden -> hidden weights
    bh_ref   : (1, Dh)            hidden bias
    bo_ref   : (1, Dout)          output bias
    out_ref  : (Bt, Tc, Dout)     output chunk
    h_scr    : (Bt, Dh) f32       hidden carry across chunks (inner grid axis)
    """
    c = pl.program_id(1)                       # chunk index (inner, "arbitrary")
    bt = x_ref.shape[0]
    din = x_ref.shape[2]

    @pl.when(c == 0)
    def _():                                   # re-init per batch tile
        h_scr[...] = h0_ref[:, 0, :].astype(jnp.float32)

    # ---- hoisted bulk GEMMs (no dependence on the recurrence) --------------
    x2d = x_ref[...].reshape(bt * tc, din).astype(jnp.float32)
    u2d = jnp.dot(x2d, wxh_ref[...],
                  preferred_element_type=jnp.float32) + bh_ref[...]   # (B*Tc, Dh)
    xo2d = jnp.dot(x2d, wxo_ref[...],
                   preferred_element_type=jnp.float32) + bo_ref[...]  # (B*Tc, Dout)

    # Fold the carried hidden state into the first timestep's drive so the
    # scan below produces h_t directly:  v_0 <- v_0 + h_prev @ A.
    h_prev = h_scr[...]                                              # (Bt, Dh)
    h_prev_a = jnp.dot(h_prev, apow_ref[0],
                       preferred_element_type=jnp.float32)           # (Bt, Dh)

    u = u2d.reshape(bt, tc, dh)
    t_pos = lax.broadcasted_iota(jnp.int32, (bt, tc, dh), 1)
    u = u + jnp.where(t_pos == 0, h_prev_a[:, None, :], 0.0)

    # ---- linear recurrence as a Hillis-Steele scan --------------------------
    # h_t = h_{t-1} @ A + v_t  ==>  ceil(log2(Tc)) bulk GEMMs with A^(2^k).
    for k in range(n_scan):
        d = 1 << k
        contrib = jnp.dot(u.reshape(bt * tc, dh), apow_ref[k],
                          preferred_element_type=jnp.float32
                          ).reshape(bt, tc, dh)
        shifted = jnp.concatenate(
            [jnp.zeros((bt, d, dh), jnp.float32), contrib[:, :tc - d, :]],
            axis=1)
        u = u + shifted
    # Now u[:, t, :] == h_t  (hidden AFTER consuming timestep t).

    # Hidden state fed INTO timestep t is h_{t-1} (h_prev for t == 0).
    if tc > 1:
        old_h = jnp.concatenate([h_prev[:, None, :], u[:, :tc - 1, :]], axis=1)
    else:
        old_h = h_prev[:, None, :]

    # ---- bulk output GEMM + single full-tile store --------------------------
    out2d = xo2d + jnp.dot(old_h.reshape(bt * tc, dh), who_ref[...],
                           preferred_element_type=jnp.float32)
    out_ref[...] = out2d.reshape(bt, tc, dout).astype(out_ref.dtype)

    # Carry the last hidden state of this chunk to the next one.
    h_scr[...] = u[:, tc - 1, :]


def rnn_layer_forward(x, hidden, params, direction=1, *, max_chunk=64,
                      batch_tile=None, vmem_limit_bytes=64 * 1024 * 1024):
    """x: (B, T, dim_input), hidden: (B, dim_hidden) -> (B, T, dim_output)."""
    B, T, Din = x.shape
    Dh = hidden.shape[1]
    w_i2h = params["w_i2h"].astype(jnp.float32)
    b_i2h = params["b_i2h"].astype(jnp.float32)
    w_i2o = params["w_i2o"].astype(jnp.float32)
    b_i2o = params["b_i2o"].astype(jnp.float32)
    Dout = w_i2o.shape[0]

    # Split the concatenated-input Linear weights, transposed to y = x @ W form.
    Wx_h = w_i2h[:, :Din].T          # (Din, Dh)
    Wh_h = w_i2h[:, Din:].T          # (Dh, Dh)  == A
    Wx_o = w_i2o[:, :Din].T          # (Din, Dout)
    Wh_o = w_i2o[:, Din:].T          # (Dh, Dout)
    bh = b_i2h.reshape(1, Dh)
    bo = b_i2o.reshape(1, Dout)

    # Reverse direction: the module appends outputs in processing order, so a
    # wrapper-side flip of x followed by a forward scan is exact.
    if direction != 1:
        x = jnp.flip(x, axis=1)

    # Chunking along time. Tc is a multiple of 8 (sublane rule) unless it spans
    # the whole sequence; awkward T is handled by zero-padding + slicing, never
    # by blowing the chunk up to T (review: VMEM-safe fallback).
    if T <= max_chunk:
        Tc, T_pad = T, T
    else:
        Tc = max(8, (max_chunk // 8) * 8)
        T_pad = ((T + Tc - 1) // Tc) * Tc
    if T_pad != T:
        x = jnp.pad(x, ((0, 0), (0, T_pad - T), (0, 0)))
    NC = T_pad // Tc

    # Optional batch tiling -> leading "parallel" grid axis (v7x megacore).
    Bt = B if batch_tile is None else batch_tile
    if B % Bt != 0:
        raise ValueError("batch_tile must divide the batch size")
    NB = B // Bt

    # Precompute A^(2^k) for the scan (repeated squaring in the wrapper).
    n_scan = (Tc - 1).bit_length()              # number of k with 2^k < Tc
    pows = [Wh_h]
    for _ in range(max(1, n_scan) - 1):
        pows.append(pows[-1] @ pows[-1])
    apow = jnp.stack(pows, axis=0)              # (L, Dh, Dh)

    hidden3 = hidden.reshape(B, 1, Dh).astype(jnp.float32)

    kernel = functools.partial(_rnn_scan_kernel, tc=Tc, dh=Dh, dout=Dout,
                               n_scan=n_scan)

    const2 = lambda b, c: (0, 0)
    const3 = lambda b, c: (0, 0, 0)

    out = pl.pallas_call(
        kernel,
        out_shape=jax.ShapeDtypeStruct((B, T_pad, Dout), x.dtype),
        grid_spec=pltpu.PrefetchScalarGridSpec(
            num_scalar_prefetch=0,
            grid=(NB, NC),
            in_specs=[
                pl.BlockSpec((Bt, Tc, Din), lambda b, c: (b, c, 0)),   # x chunk
                pl.BlockSpec((Bt, 1, Dh), lambda b, c: (b, 0, 0)),     # h0
                pl.BlockSpec((Din, Dh), const2),                       # Wx_h
                pl.BlockSpec((Din, Dout), const2),                     # Wx_o
                pl.BlockSpec((Dh, Dout), const2),                      # Wh_o
                pl.BlockSpec(apow.shape, const3),                      # A^(2^k)
                pl.BlockSpec((1, Dh), const2),                         # b_h
                pl.BlockSpec((1, Dout), const2),                       # b_o
            ],
            out_specs=pl.BlockSpec((Bt, Tc, Dout), lambda b, c: (b, c, 0)),
            scratch_shapes=[pltpu.VMEM((Bt, Dh), jnp.float32)],        # h carry
        ),
        compiler_params=pltpu.CompilerParams(
            dimension_semantics=("parallel", "arbitrary"),
            vmem_limit_bytes=vmem_limit_bytes),
    )(x, hidden3, Wx_h, Wx_o, Wh_o, apow, bh, bo)

    if T_pad != T:
        out = out[:, :T, :]
    return out


def init_params(key, dim_input, dim_hidden, dim_output):
    """Deterministic init mimicking nn.Linear (uniform +-1/sqrt(fan_in))."""
    fan_in = dim_input + dim_hidden
    bound = 1.0 / jnp.sqrt(jnp.float32(fan_in))
    k1, k2, k3, k4 = jax.random.split(key, 4)
    return {
        "w_i2h": jax.random.uniform(k1, (dim_hidden, fan_in), jnp.float32,
                                    -bound, bound),
        "b_i2h": jax.random.uniform(k2, (dim_hidden,), jnp.float32,
                                    -bound, bound),
        "w_i2o": jax.random.uniform(k3, (dim_output, fan_in), jnp.float32,
                                    -bound, bound),
        "b_i2o": jax.random.uniform(k4, (dim_output,), jnp.float32,
                                    -bound, bound),
    }


def rnn_layer_reference(x, hidden, params, direction=1):
    """Pure-JAX reference matching the PyTorch forward exactly."""
    w_i2h, b_i2h = params["w_i2h"], params["b_i2h"]
    w_i2o, b_i2o = params["w_i2o"], params["b_i2o"]
    T = x.shape[1]
    ts = range(T) if direction == 1 else range(T - 1, -1, -1)
    outs = []
    h = hidden
    for t in ts:
        combined = jnp.concatenate([x[:, t, :], h], axis=1)
        h = combined @ w_i2h.T + b_i2h
        outs.append(combined @ w_i2o.T + b_i2o)
    return jnp.stack(outs, axis=1)


if __name__ == "__main__":
    dim_input, dim_hidden, dim_output = 16, 32, 16
    key = jax.random.PRNGKey(0)
    k1, k2, k3, kp = jax.random.split(key, 4)
    params = init_params(kp, dim_input, dim_hidden, dim_output)
    B = 2
    hidden = jnp.zeros((B, dim_hidden), jnp.float32)   # init_hidden

    # Case 1: small sequence, single chunk.
    x = jax.random.normal(k1, (B, 8, dim_input), jnp.float32)
    for direction in (1, -1):
        out = jax.block_until_ready(
            rnn_layer_forward(x, hidden, params, direction))
        ref = rnn_layer_reference(x, hidden, params, direction)
        assert out.shape == ref.shape
        assert jnp.allclose(out, ref, atol=1e-4, rtol=1e-4), (
            f"mismatch: direction={direction}, single chunk")

    # Case 2: multi-chunk carry + batch-parallel grid axis (2 batch tiles).
    x2 = jax.random.normal(k2, (B, 32, dim_input), jnp.float32)
    for direction in (1, -1):
        out = jax.block_until_ready(
            rnn_layer_forward(x2, hidden, params, direction,
                              max_chunk=8, batch_tile=1))
        ref = rnn_layer_reference(x2, hidden, params, direction)
        assert jnp.allclose(out, ref, atol=1e-4, rtol=1e-4), (
            f"mismatch: direction={direction}, multi chunk / batch tiles")

    # Case 3: ragged T (pad-to-chunk + slice path).
    x3 = jax.random.normal(k3, (B, 20, dim_input), jnp.float32)
    for direction in (1, -1):
        out = jax.block_until_ready(
            rnn_layer_forward(x3, hidden, params, direction, max_chunk=8))
        ref = rnn_layer_reference(x3, hidden, params, direction)
        assert out.shape == ref.shape
        assert jnp.allclose(out, ref, atol=1e-4, rtol=1e-4), (
            f"mismatch: direction={direction}, ragged T")

    print("KERNEL_OK")
</pallas_src>

<mosaic_0001>
module attributes {stable_mosaic.version = 11 : i64} {
  func.func @_rnn_scan_kernel(%arg0: i32, %arg1: i32, %arg2: memref<2x8x16xf32, #tpu.memory_space<vmem>>, %arg3: memref<2x1x32xf32, #tpu.memory_space<vmem>>, %arg4: memref<16x32xf32, #tpu.memory_space<vmem>>, %arg5: memref<16x16xf32, #tpu.memory_space<vmem>>, %arg6: memref<32x16xf32, #tpu.memory_space<vmem>>, %arg7: memref<3x32x32xf32, #tpu.memory_space<vmem>>, %arg8: memref<1x32xf32, #tpu.memory_space<vmem>>, %arg9: memref<1x16xf32, #tpu.memory_space<vmem>>, %arg10: memref<2x8x16xf32, #tpu.memory_space<vmem>>, %arg11: memref<2x32xf32, #tpu.memory_space<vmem>>) attributes {dimension_semantics = [#tpu.dimension_semantics<parallel>, #tpu.dimension_semantics<arbitrary>], iteration_bounds = array<i64: 1, 1>, scalar_prefetch = 0 : i64, scratch_operands = 1 : i64, tpu.core_type = #tpu.core_type<tc>, window_params = [{transform_indices = @transform_0, window_bounds = array<i64: 2, 8, 16>}, {transform_indices = @transform_1, window_bounds = array<i64: 2, 1, 32>}, {pipeline_mode = #tpu.pipeline_mode<synchronous>, transform_indices = @transform_2, window_bounds = array<i64: 16, 32>}, {pipeline_mode = #tpu.pipeline_mode<synchronous>, transform_indices = @transform_3, window_bounds = array<i64: 16, 16>}, {pipeline_mode = #tpu.pipeline_mode<synchronous>, transform_indices = @transform_4, window_bounds = array<i64: 32, 16>}, {pipeline_mode = #tpu.pipeline_mode<synchronous>, transform_indices = @transform_5, window_bounds = array<i64: 3, 32, 32>}, {pipeline_mode = #tpu.pipeline_mode<synchronous>, transform_indices = @transform_6, window_bounds = array<i64: 1, 32>}, {pipeline_mode = #tpu.pipeline_mode<synchronous>, transform_indices = @transform_7, window_bounds = array<i64: 1, 16>}, {transform_indices = @transform_8, window_bounds = array<i64: 2, 8, 16>}]} {
    %c0_i32 = arith.constant 0 : i32
    %0 = arith.cmpi eq, %arg1, %c0_i32 : i32
    %1 = arith.extui %0 : i1 to i32
    %c0_i32_0 = arith.constant 0 : i32
    %2 = arith.cmpi ne, %1, %c0_i32_0 : i32
    scf.if %2 {
      %c0_41 = arith.constant 0 : index
      %c0_42 = arith.constant 0 : index
      %c0_43 = arith.constant 0 : index
      %68 = vector.load %arg3[%c0_41, %c0_42, %c0_43] : memref<2x1x32xf32, #tpu.memory_space<vmem>>, vector<2x1x32xf32>
      %69 = vector.shape_cast %68 : vector<2x1x32xf32> to vector<2x32xf32>
      %c0_44 = arith.constant 0 : index
      %c0_45 = arith.constant 0 : index
      %70 = vector.load %arg11[%c0_44, %c0_45] : memref<2x32xf32, #tpu.memory_space<vmem>>, vector<2x32xf32>
      tpu.vector_store %arg11[%c0_44, %c0_45], %69 {strides = array<i32>} : memref<2x32xf32, #tpu.memory_space<vmem>>, vector<2x32xf32>,
    } else {
    }
    %c0 = arith.constant 0 : index
    %c0_1 = arith.constant 0 : index
    %c0_2 = arith.constant 0 : index
    %3 = vector.load %arg2[%c0, %c0_1, %c0_2] : memref<2x8x16xf32, #tpu.memory_space<vmem>>, vector<2x8x16xf32>
    %4 = vector.shape_cast %3 : vector<2x8x16xf32> to vector<16x16xf32>
    %c0_3 = arith.constant 0 : index
    %c0_4 = arith.constant 0 : index
    %5 = vector.load %arg4[%c0_3, %c0_4] : memref<16x32xf32, #tpu.memory_space<vmem>>, vector<16x32xf32>
    %cst = arith.constant dense<0.000000e+00> : vector<16x32xf32>
    %6 = tpu.matmul %4, %5, %cst {dimension_numbers = #tpu.dot_dimension_numbers<[1], [0], [0], [1], [0, 0, 1, 1], [], []>} : vector<16x16xf32>, vector<16x32xf32>, vector<16x32xf32> -> vector<16x32xf32>
    %c0_5 = arith.constant 0 : index
    %c0_6 = arith.constant 0 : index
    %7 = vector.load %arg8[%c0_5, %c0_6] : memref<1x32xf32, #tpu.memory_space<vmem>>, vector<1x32xf32>
    %8 = vector.broadcast %7 : vector<1x32xf32> to vector<16x32xf32>
    %9 = arith.addf %6, %8 : vector<16x32xf32>
    %c0_7 = arith.constant 0 : index
    %c0_8 = arith.constant 0 : index
    %10 = vector.load %arg5[%c0_7, %c0_8] : memref<16x16xf32, #tpu.memory_space<vmem>>, vector<16x16xf32>
    %cst_9 = arith.constant dense<0.000000e+00> : vector<16x16xf32>
    %11 = tpu.matmul %4, %10, %cst_9 {dimension_numbers = #tpu.dot_dimension_numbers<[1], [0], [0], [1], [0, 0, 1, 1], [], []>} : vector<16x16xf32>, vector<16x16xf32>, vector<16x16xf32> -> vector<16x16xf32>
    %c0_10 = arith.constant 0 : index
    %c0_11 = arith.constant 0 : index
    %12 = vector.load %arg9[%c0_10, %c0_11] : memref<1x16xf32, #tpu.memory_space<vmem>>, vector<1x16xf32>
    %13 = vector.broadcast %12 : vector<1x16xf32> to vector<16x16xf32>
    %14 = arith.addf %11, %13 : vector<16x16xf32>
    %c0_12 = arith.constant 0 : index
    %c0_13 = arith.constant 0 : index
    %15 = vector.load %arg11[%c0_12, %c0_13] : memref<2x32xf32, #tpu.memory_space<vmem>>, vector<2x32xf32>
    %c0_14 = arith.constant 0 : index
    %c0_15 = arith.constant 0 : index
    %c0_16 = arith.constant 0 : index
    %16 = vector.load %arg7[%c0_14, %c0_15, %c0_16] : memref<3x32x32xf32, #tpu.memory_space<vmem>>, vector<1x32x32xf32>
    %17 = vector.shape_cast %16 : vector<1x32x32xf32> to vector<32x32xf32>
    %cst_17 = arith.constant dense<0.000000e+00> : vector<2x32xf32>
    %18 = tpu.matmul %15, %17, %cst_17 {dimension_numbers = #tpu.dot_dimension_numbers<[1], [0], [0], [1], [0, 0, 1, 1], [], []>} : vector<2x32xf32>, vector<32x32xf32>, vector<2x32xf32> -> vector<2x32xf32>
    %19 = vector.shape_cast %9 : vector<16x32xf32> to vector<2x8x32xf32>
    %20 = tpu.iota {dimensions = array<i32: 1>} : vector<2x8x32xi32>
    %c0_i32_18 = arith.constant 0 : i32
    %21 = vector.broadcast %c0_i32_18 : i32 to vector<2x8x32xi32>
    %22 = arith.cmpi eq, %20, %21 : vector<2x8x32xi32>
    %23 = vector.shape_cast %18 : vector<2x32xf32> to vector<2x1x32xf32>
    %cst_19 = arith.constant 0.000000e+00 : f32
    %24 = vector.shape_cast %23 : vector<2x1x32xf32> to vector<2x1x32xf32>
    %25 = vector.broadcast %24 : vector<2x1x32xf32> to vector<2x8x32xf32>
    %26 = vector.broadcast %cst_19 : f32 to vector<2x8x32xf32>
    %27 = arith.select %22, %25, %26 : vector<2x8x32xi1>, vector<2x8x32xf32>
    %28 = arith.addf %19, %27 : vector<2x8x32xf32>
    %29 = vector.shape_cast %28 : vector<2x8x32xf32> to vector<16x32xf32>
    %c0_20 = arith.constant 0 : index
    %c0_21 = arith.constant 0 : index
    %c0_22 = arith.constant 0 : index
    %30 = vector.load %arg7[%c0_20, %c0_21, %c0_22] : memref<3x32x32xf32, #tpu.memory_space<vmem>>, vector<1x32x32xf32>
    %31 = vector.shape_cast %30 : vector<1x32x32xf32> to vector<32x32xf32>
    %cst_23 = arith.constant dense<0.000000e+00> : vector<16x32xf32>
    %32 = tpu.matmul %29, %31, %cst_23 {dimension_numbers = #tpu.dot_dimension_numbers<[1], [0], [0], [1], [0, 0, 1, 1], [], []>} : vector<16x32xf32>, vector<32x32xf32>, vector<16x32xf32> -> vector<16x32xf32>
    %33 = vector.shape_cast %32 : vector<16x32xf32> to vector<2x8x32xf32>
    %cst_24 = arith.constant 0.000000e+00 : f32
    %34 = vector.broadcast %cst_24 : f32 to vector<2x1x32xf32>
    %35 = vector.extract_strided_slice %33 {offsets = [0, 0, 0], sizes = [2, 7, 32], strides = [1, 1, 1]} : vector<2x8x32xf32> to vector<2x7x32xf32>
    %36 = tpu.concatenate %34, %35 in 1 : vector<2x1x32xf32>, vector<2x7x32xf32> -> vector<2x8x32xf32>
    %37 = arith.addf %28, %36 : vector<2x8x32xf32>
    %38 = vector.shape_cast %37 : vector<2x8x32xf32> to vector<16x32xf32>
    %c1 = arith.constant 1 : index
    %c0_25 = arith.constant 0 : index
    %c0_26 = arith.constant 0 : index
    %39 = vector.load %arg7[%c1, %c0_25, %c0_26] : memref<3x32x32xf32, #tpu.memory_space<vmem>>, vector<1x32x32xf32>
    %40 = vector.shape_cast %39 : vector<1x32x32xf32> to vector<32x32xf32>
    %cst_27 = arith.constant dense<0.000000e+00> : vector<16x32xf32>
    %41 = tpu.matmul %38, %40, %cst_27 {dimension_numbers = #tpu.dot_dimension_numbers<[1], [0], [0], [1], [0, 0, 1, 1], [], []>} : vector<16x32xf32>, vector<32x32xf32>, vector<16x32xf32> -> vector<16x32xf32>
    %42 = vector.shape_cast %41 : vector<16x32xf32> to vector<2x8x32xf32>
    %cst_28 = arith.constant 0.000000e+00 : f32
    %43 = vector.broadcast %cst_28 : f32 to vector<2x2x32xf32>
    %44 = vector.extract_strided_slice %42 {offsets = [0, 0, 0], sizes = [2, 6, 32], strides = [1, 1, 1]} : vector<2x8x32xf32> to vector<2x6x32xf32>
    %45 = tpu.concatenate %43, %44 in 1 : vector<2x2x32xf32>, vector<2x6x32xf32> -> vector<2x8x32xf32>
    %46 = arith.addf %37, %45 : vector<2x8x32xf32>
    %47 = vector.shape_cast %46 : vector<2x8x32xf32> to vector<16x32xf32>
    %c2 = arith.constant 2 : index
    %c0_29 = arith.constant 0 : index
    %c0_30 = arith.constant 0 : index
    %48 = vector.load %arg7[%c2, %c0_29, %c0_30] : memref<3x32x32xf32, #tpu.memory_space<vmem>>, vector<1x32x32xf32>
    %49 = vector.shape_cast %48 : vector<1x32x32xf32> to vector<32x32xf32>
    %cst_31 = arith.constant dense<0.000000e+00> : vector<16x32xf32>
    %50 = tpu.matmul %47, %49, %cst_31 {dimension_numbers = #tpu.dot_dimension_numbers<[1], [0], [0], [1], [0, 0, 1, 1], [], []>} : vector<16x32xf32>, vector<32x32xf32>, vector<16x32xf32> -> vector<16x32xf32>
    %51 = vector.shape_cast %50 : vector<16x32xf32> to vector<2x8x32xf32>
    %cst_32 = arith.constant 0.000000e+00 : f32
    %52 = vector.broadcast %cst_32 : f32 to vector<2x4x32xf32>
    %53 = vector.extract_strided_slice %51 {offsets = [0, 0, 0], sizes = [2, 4, 32], strides = [1, 1, 1]} : vector<2x8x32xf32> to vector<2x4x32xf32>
    %54 = tpu.concatenate %52, %53 in 1 : vector<2x4x32xf32>, vector<2x4x32xf32> -> vector<2x8x32xf32>
    %55 = arith.addf %46, %54 : vector<2x8x32xf32>
    %56 = vector.shape_cast %15 : vector<2x32xf32> to vector<2x1x32xf32>
    %57 = vector.extract_strided_slice %55 {offsets = [0, 0, 0], sizes = [2, 7, 32], strides = [1, 1, 1]} : vector<2x8x32xf32> to vector<2x7x32xf32>
    %58 = tpu.concatenate %56, %57 in 1 : vector<2x1x32xf32>, vector<2x7x32xf32> -> vector<2x8x32xf32>
    %59 = vector.shape_cast %58 : vector<2x8x32xf32> to vector<16x32xf32>
    %c0_33 = arith.constant 0 : index
    %c0_34 = arith.constant 0 : index
    %60 = vector.load %arg6[%c0_33, %c0_34] : memref<32x16xf32, #tpu.memory_space<vmem>>, vector<32x16xf32>
    %cst_35 = arith.constant dense<0.000000e+00> : vector<16x16xf32>
    %61 = tpu.matmul %59, %60, %cst_35 {dimension_numbers = #tpu.dot_dimension_numbers<[1], [0], [0], [1], [0, 0, 1, 1], [], []>} : vector<16x32xf32>, vector<32x16xf32>, vector<16x16xf32> -> vector<16x16xf32>
    %62 = arith.addf %14, %61 : vector<16x16xf32>
    %63 = vector.shape_cast %62 : vector<16x16xf32> to vector<2x8x16xf32>
    %c0_36 = arith.constant 0 : index
    %c0_37 = arith.constant 0 : index
    %c0_38 = arith.constant 0 : index
    %64 = vector.load %arg10[%c0_36, %c0_37, %c0_38] : memref<2x8x16xf32, #tpu.memory_space<vmem>>, vector<2x8x16xf32>
    tpu.vector_store %arg10[%c0_36, %c0_37, %c0_38], %63 {strides = array<i32>} : memref<2x8x16xf32, #tpu.memory_space<vmem>>, vector<2x8x16xf32>,
    %65 = vector.extract_strided_slice %55 {offsets = [0, 7, 0], sizes = [2, 1, 32], strides = [1, 1, 1]} : vector<2x8x32xf32> to vector<2x1x32xf32>
    %66 = vector.shape_cast %65 : vector<2x1x32xf32> to vector<2x32xf32>
    %c0_39 = arith.constant 0 : index
    %c0_40 = arith.constant 0 : index
    %67 = vector.load %arg11[%c0_39, %c0_40] : memref<2x32xf32, #tpu.memory_space<vmem>>, vector<2x32xf32>
    tpu.vector_store %arg11[%c0_39, %c0_40], %66 {strides = array<i32>} : memref<2x32xf32, #tpu.memory_space<vmem>>, vector<2x32xf32>,
    return
  }
  func.func @transform_0(%arg0: i32, %arg1: i32) -> (i32, i32, i32) {
    %c0_i32 = arith.constant 0 : i32
    %c0_i32_0 = arith.constant 0 : i32
    return %arg0, %arg1, %c0_i32 : i32, i32, i32
  }
  func.func @transform_1(%arg0: i32, %arg1: i32) -> (i32, i32, i32) {
    %c0_i32 = arith.constant 0 : i32
    %c0_i32_0 = arith.constant 0 : i32
    %c0_i32_1 = arith.constant 0 : i32
    return %arg0, %c0_i32, %c0_i32_0 : i32, i32, i32
  }
  func.func @transform_2(%arg0: i32, %arg1: i32) -> (i32, i32) {
    %c0_i32 = arith.constant 0 : i32
    %c0_i32_0 = arith.constant 0 : i32
    %c0_i32_1 = arith.constant 0 : i32
    return %c0_i32, %c0_i32_0 : i32, i32
  }
  func.func @transform_3(%arg0: i32, %arg1: i32) -> (i32, i32) {
    %c0_i32 = arith.constant 0 : i32
    %c0_i32_0 = arith.constant 0 : i32
    %c0_i32_1 = arith.constant 0 : i32
    return %c0_i32, %c0_i32_0 : i32, i32
  }
  func.func @transform_4(%arg0: i32, %arg1: i32) -> (i32, i32) {
    %c0_i32 = arith.constant 0 : i32
    %c0_i32_0 = arith.constant 0 : i32
    %c0_i32_1 = arith.constant 0 : i32
    return %c0_i32, %c0_i32_0 : i32, i32
  }
  func.func @transform_5(%arg0: i32, %arg1: i32) -> (i32, i32, i32) {
    %c0_i32 = arith.constant 0 : i32
    %c0_i32_0 = arith.constant 0 : i32
    %c0_i32_1 = arith.constant 0 : i32
    %c0_i32_2 = arith.constant 0 : i32
    return %c0_i32, %c0_i32_0, %c0_i32_1 : i32, i32, i32
  }
  func.func @transform_6(%arg0: i32, %arg1: i32) -> (i32, i32) {
    %c0_i32 = arith.constant 0 : i32
    %c0_i32_0 = arith.constant 0 : i32
    %c0_i32_1 = arith.constant 0 : i32
    return %c0_i32, %c0_i32_0 : i32, i32
  }
  func.func @transform_7(%arg0: i32, %arg1: i32) -> (i32, i32) {
    %c0_i32 = arith.constant 0 : i32
    %c0_i32_0 = arith.constant 0 : i32
    %c0_i32_1 = arith.constant 0 : i32
    return %c0_i32, %c0_i32_0 : i32, i32
  }
  func.func @transform_8(%arg0: i32, %arg1: i32) -> (i32, i32, i32) {
    %c0_i32 = arith.constant 0 : i32
    %c0_i32_0 = arith.constant 0 : i32
    return %arg0, %arg1, %c0_i32 : i32, i32, i32
  }
}

</mosaic_0001>

<llo_original>
// kernel: tpu_custom_call.1
$region0: #{tpu_custom_call.1}
  #allocation0 [shape = 'u32[]', space=smem, size = 0x4, offset = 0x4, fixed_abs, tag = 'smem constant byte address 0x4 - core index']
  #allocation1 [shape = 'u32[72,128]{1,0:T(1,128)}', space=vmem, size = 0x9000, scoped, tag = 'internal scratch']
  #allocation2 [shape = 'f32[2,32]{1,0:T(2,128)}', space=vmem, size = 0x400, scoped, tag = 'scratch operand']
  %s0 = inlined_call_operand.vmem [shape: f32[2,8,16], index: 0, kind: input, shape index: {}]
  %s1 = inlined_call_operand.hbm [shape: f32[2,1,32], index: 1, kind: input, shape index: {}]
  %s2 = inlined_call_operand.vmem [shape: f32[16,32], index: 2, kind: input, shape index: {}]
  %s3 = inlined_call_operand.vmem [shape: f32[16,16], index: 3, kind: input, shape index: {}]
  %s4 = inlined_call_operand.vmem [shape: f32[32,16], index: 4, kind: input, shape index: {}]
  %s5 = inlined_call_operand.hbm [shape: f32[3,32,32], index: 5, kind: input, shape index: {}]
  %s6 = inlined_call_operand.vmem [shape: f32[1,32], index: 6, kind: input, shape index: {}]
  %s7 = inlined_call_operand.vmem [shape: f32[1,16], index: 7, kind: input, shape index: {}]
  %s8 = inlined_call_operand.hbm [shape: f32[2,8,16], index: 8, kind: output, shape index: {}]
  %s9 = sld [smem:[#allocation0]]
  $region54: #{tpu_custom_call.1} parent=0
    _
  %s11 = ssub.s32 1, %s9
  %s12 = scalar_select 0, %s11, %s9
  $region1: #{tpu_custom_call.1} parent=0
    #allocation3 [shape = 'u8[1024]{0}', space=vmem, size = 0x400, scoped, tag = 'input window, operand 1, single buffered']
    #allocation4 [shape = 's32[1]{0}', space=sflag, size = 0x4, scoped, tag = 'scoped memory for tpu_custom_call.1']
    #allocation5 [shape = 's32[1]{0}', space=sflag, size = 0x4, scoped, tag = 'scoped memory for tpu_custom_call.1']
    #allocation6 [shape = 'u8[49152]{0}', space=vmem, size = 0xc000, scoped, tag = 'input window, operand 5, single buffered']
    #allocation7 [shape = 's32[1]{0}', space=sflag, size = 0x4, scoped, tag = 'scoped memory for tpu_custom_call.1']
    #allocation8 [shape = 'u8[8192]{0}', space=vmem, size = 0x2000, scoped, tag = 'output window, operand 0, single buffered']
    %13 = vsyncpa [#allocation4], 0
    %14 = vsyncpa [#allocation7], 0
    %15 = vsyncpa [#allocation5], 0
    // Predicated region
    $region2: #{tpu_custom_call.1} parent=1 // pred_check
      _
    $region3: #{tpu_custom_call.1} parent=1 // pred_check_branch
      %17 = sbr.rel (0) target = $region5
    $region4: #{tpu_custom_call.1} parent=1 // pred_region
      _
    $region5: #{tpu_custom_call.1} parent=1 // pred_fallthru
      _
    // Predicated region
    $region6: #{tpu_custom_call.1} parent=1 // pred_check
      _
    $region7: #{tpu_custom_call.1} parent=1 // pred_check_branch
      %19 = sbr.rel (0) target = $region9
    $region8: #{tpu_custom_call.1} parent=1 // pred_region
      %21 = vsyncadd [#allocation4], 0
      %s22 = sshll.u32 %s1, 4
      %s23 = int_to_ptr.hbm [resolvable:$true] %s22
      %s24 = sshll.u32 [#allocation3], 4
      %s25 = int_to_ptr.vmem [resolvable:$true] %s24
      %30 = dma.hbm_to_vmem [thread:$0]  %s23, 32, %s25, [#allocation4], 16, 16, 1
    $region9: #{tpu_custom_call.1} parent=1 // pred_fallthru
      _
    // Predicated region
    $region10: #{tpu_custom_call.1} parent=1 // pred_check
      _
    $region11: #{tpu_custom_call.1} parent=1 // pred_check_branch
      %32 = sbr.rel (0) target = $region13
    $region12: #{tpu_custom_call.1} parent=1 // pred_region
      _
    $region13: #{tpu_custom_call.1} parent=1 // pred_fallthru
      _
    // Predicated region
    $region14: #{tpu_custom_call.1} parent=1 // pred_check
      _
    $region15: #{tpu_custom_call.1} parent=1 // pred_check_branch
      %34 = sbr.rel (0) target = $region17
    $region16: #{tpu_custom_call.1} parent=1 // pred_region
      _
    $region17: #{tpu_custom_call.1} parent=1 // pred_fallthru
      _
    // Predicated region
    $region18: #{tpu_custom_call.1} parent=1 // pred_check
      _
    $region19: #{tpu_custom_call.1} parent=1 // pred_check_branch
      %36 = sbr.rel (0) target = $region21
    $region20: #{tpu_custom_call.1} parent=1 // pred_region
      _
    $region21: #{tpu_custom_call.1} parent=1 // pred_fallthru
      _
    // Predicated region
    $region22: #{tpu_custom_call.1} parent=1 // pred_check
      _
    $region23: #{tpu_custom_call.1} parent=1 // pred_check_branch
      %38 = sbr.rel (0) target = $region25
    $region24: #{tpu_custom_call.1} parent=1 // pred_region
      %40 = vsyncadd [#allocation7], 0
      %s41 = sshll.u32 %s5, 4
      %s42 = int_to_ptr.hbm [resolvable:$true] %s41
      %s43 = sshll.u32 [#allocation6], 4
      %s44 = int_to_ptr.vmem [resolvable:$true] %s43
      %49 = dma.hbm_to_vmem [thread:$0]  %s42, 1536, %s44, [#allocation7], 128, 128, 8
    $region25: #{tpu_custom_call.1} parent=1 // pred_fallthru
      _
    // Predicated region
    $region26: #{tpu_custom_call.1} parent=1 // pred_check
      _
    $region27: #{tpu_custom_call.1} parent=1 // pred_check_branch
      %51 = sbr.rel (0) target = $region29
    $region28: #{tpu_custom_call.1} parent=1 // pred_region
      _
    $region29: #{tpu_custom_call.1} parent=1 // pred_fallthru
      _
    // Predicated region
    $region30: #{tpu_custom_call.1} parent=1 // pred_check
      _
    $region31: #{tpu_custom_call.1} parent=1 // pred_check_branch
      %53 = sbr.rel (0) target = $region33
    $region32: #{tpu_custom_call.1} parent=1 // pred_region
      _
    $region33: #{tpu_custom_call.1} parent=1 // pred_fallthru
      _
    // Predicated region
    $region34: #{tpu_custom_call.1} parent=1 // pred_check
      _
    $region35: #{tpu_custom_call.1} parent=1 // pred_check_branch
      %55 = sbr.rel (0) target = $region37
    $region36: #{tpu_custom_call.1} parent=1 // pred_region
      %57 = dma.done [#allocation4], 32
    $region37: #{tpu_custom_call.1} parent=1 // pred_fallthru
      _
    // Predicated region
    $region38: #{tpu_custom_call.1} parent=1 // pred_check
      _
    $region39: #{tpu_custom_call.1} parent=1 // pred_check_branch
      %59 = sbr.rel (0) target = $region41
    $region40: #{tpu_custom_call.1} parent=1 // pred_region
      %61 = dma.done [#allocation7], 1536
    $region41: #{tpu_custom_call.1} parent=1 // pred_fallthru
      _
    %p62 = scmp.eq.s32.totalorder 0, 0
    // Predicated region
    $region42: #{tpu_custom_call.1} parent=1 // pred_check
      %p63 = pneg %p62
    $region43: #{tpu_custom_call.1} parent=1 // pred_check_branch
      %65 = sbr.rel (%p63) target = $region45
    $region44: #{tpu_custom_call.1} parent=1 // pred_region
      %v66 = vld [vmem:[#allocation3] sm:$0x1]
      %v67 = vld [vmem:[#allocation3 + $0x1] sm:$0x1]
      %70 = vst [vmem:[#allocation1] ss:$9 sm:$0xff] %v66
      %s71 = scalar_lea.vmem [#allocation1], 1
      %72 = vst [vmem:[%s71] ss:$9 sm:$0xff] %v67
      %v73 = vld [vmem:[#allocation1] sm:$0xff]
      %vm75 = vcmask 254976
      %76 = vst.msk [vmem:[#allocation2] sm:$0x3] %vm75, %v73
    $region45: #{tpu_custom_call.1} parent=1 // pred_fallthru
      _
    %v77 = vld [vmem:[%s0] sm:$0xff]
    %v78 = vld [vmem:[%s0 + $0x8] sm:$0xff]
    %v79 = vld [vmem:[%s2] sm:$0xff]
    %v80 = vld [vmem:[%s2 + $0x8] sm:$0xff]
    %v81 = vld [vmem:[%s6] sm:$0x1]
    %v83 = vperm.slane %v81, 0
    %vm85 = vcmask 130048
    %v87 = vsel %vm85, %v77, 0
    %v90 = vsel %vm85, %v78, 0
    %92 = vmatpush.msra.mxu0 0.0
    %93 = vmatpush.msra.mxu0 0.0
    %94 = vmatpush.msra.mxu0 0.0
    %95 = vmatpush.msra.mxu0 0.0
    %96 = vmatpush.msra.mxu0 0.0
    %97 = vmatpush.msra.mxu0 0.0
    %98 = vmatpush.msra.mxu0 0.0
    %99 = vmatpush.msra.mxu0 0.0
    %100 = vmatpush.msra.mxu0 0.0
    %101 = vmatpush.msra.mxu0 0.0
    %102 = vmatpush.msra.mxu0 0.0
    %103 = vmatpush.msra.mxu0 0.0
    %104 = vmatpush.msra.mxu0 0.0
    %105 = vmatpush.msra.mxu0 0.0
    %106 = vmatpush.msra.mxu0 %v80
    %107 = vmatpush.msra.mxu0 %v79
    %108 = vmatmul.f32.gmra.mxu0 %v87
    %v109 = vpop.f32.mrf.mxu0
    %v110 = vadd.f32 %v83, %v109
    %111 = vmatmul.f32.gmra.mxu0 %v90
    %v112 = vpop.f32.mrf.mxu0
    %v113 = vadd.f32 %v83, %v112
    %114 = vdwg.mxu0
    %v115 = vld [vmem:[%s3] sm:$0xff]
    %v116 = vld [vmem:[%s3 + $0x8] sm:$0xff]
    %v117 = vld [vmem:[%s7] sm:$0x1]
    %v119 = vperm.slane %v117, 0
    %121 = vmatpush.msra.mxu0 0.0
    %122 = vmatpush.msra.mxu0 0.0
    %123 = vmatpush.msra.mxu0 0.0
    %124 = vmatpush.msra.mxu0 0.0
    %125 = vmatpush.msra.mxu0 0.0
    %126 = vmatpush.msra.mxu0 0.0
    %127 = vmatpush.msra.mxu0 0.0
    %128 = vmatpush.msra.mxu0 0.0
    %129 = vmatpush.msra.mxu0 0.0
    %130 = vmatpush.msra.mxu0 0.0
    %131 = vmatpush.msra.mxu0 0.0
    %132 = vmatpush.msra.mxu0 0.0
    %133 = vmatpush.msra.mxu0 0.0
    %134 = vmatpush.msra.mxu0 0.0
    %135 = vmatpush.msra.mxu0 %v116
    %136 = vmatpush.msra.mxu0 %v115
    %137 = vmatmul.f32.gmra.mxu0 %v87
    %v138 = vpop.f32.mrf.mxu0
    %v139 = vadd.f32 %v119, %v138
    %140 = vmatmul.f32.gmra.mxu0 %v90
    %v141 = vpop.f32.mrf.mxu0
    %v142 = vadd.f32 %v119, %v141
    %143 = vdwg.mxu0
    %v144 = vld [vmem:[#allocation2] sm:$0x3]
    %v145 = vld [vmem:[#allocation6] sm:$0xff]
    %v146 = vld [vmem:[#allocation6 + $0x8] sm:$0xff]
    %v147 = vld [vmem:[#allocation6 + $0x10] sm:$0xff]
    %v148 = vld [vmem:[#allocation6 + $0x18] sm:$0xff]
    %vm149 = vcmask 261120
    %v151 = vsel %vm149, %v144, 0
    %153 = vmatpush.msra.mxu0 0.0
    %154 = vmatpush.msra.mxu0 0.0
    %155 = vmatpush.msra.mxu0 0.0
    %156 = vmatpush.msra.mxu0 0.0
    %157 = vmatpush.msra.mxu0 0.0
    %158 = vmatpush.msra.mxu0 0.0
    %159 = vmatpush.msra.mxu0 0.0
    %160 = vmatpush.msra.mxu0 0.0
    %161 = vmatpush.msra.mxu0 0.0
    %162 = vmatpush.msra.mxu0 0.0
    %163 = vmatpush.msra.mxu0 0.0
    %164 = vmatpush.msra.mxu0 0.0
    %165 = vmatpush.msra.mxu0 %v148
    %166 = vmatpush.msra.mxu0 %v147
    %167 = vmatpush.msra.mxu0 %v146
    %168 = vmatpush.msra.mxu0 %v145
    %169 = vmatmul.f32.gmra.mxu0 %v151
    %v170 = vpop.f32.mrf.mxu0
    %v171 = vadd.f32 0.0, %v170
    %172 = vdwg.mxu0
    %v173 = vlaneseq
    %v174 = vshrl.u32 %v173, 7
    %vm175 = vcmp.eq.s32.totalorder %v174, 0
    %v177 = vrot.slane %v171, 1
    %v178 = vperm.slane %v171, 0
    %v179 = vperm.slane %v177, 0
    %v182 = vsel %vm175, %v178, 0.0
    %v183 = vsel %vm175, %v179, 0.0
    %v184 = vadd.f32 %v110, %v182
    %v185 = vadd.f32 %v113, %v183
    %v187 = vsel %vm149, %v184, 0
    %v190 = vsel %vm149, %v185, 0
    %192 = vmatpush.msra.mxu0 0.0
    %193 = vmatpush.msra.mxu0 0.0
    %194 = vmatpush.msra.mxu0 0.0
    %195 = vmatpush.msra.mxu0 0.0
    %196 = vmatpush.msra.mxu0 0.0
    %197 = vmatpush.msra.mxu0 0.0
    %198 = vmatpush.msra.mxu0 0.0
    %199 = vmatpush.msra.mxu0 0.0
    %200 = vmatpush.msra.mxu0 0.0
    %201 = vmatpush.msra.mxu0 0.0
    %202 = vmatpush.msra.mxu0 0.0
    %203 = vmatpush.msra.mxu0 0.0
    %204 = vmatpush.msra.mxu0 %v148
    %205 = vmatpush.msra.mxu0 %v147
    %206 = vmatpush.msra.mxu0 %v146
    %207 = vmatpush.msra.mxu0 %v145
    %208 = vmatmul.f32.gmra.mxu0 %v187
    %v209 = vpop.f32.mrf.mxu0
    %v210 = vadd.f32 0.0, %v209
    %211 = vmatmul.f32.gmra.mxu0 %v190
    %v212 = vpop.f32.mrf.mxu0
    %v213 = vadd.f32 0.0, %v212
    %214 = vdwg.mxu0
    %v217 = vrot.slane %v210, 7
    %v218 = vrot.slane %v213, 7
    %vm221 = vcmask 1040384
    %v222 = vsel %vm221, 0.0, %v217
    %v223 = vsel %vm221, 0.0, %v218
    %v224 = vadd.f32 %v184, %v222
    %v225 = vadd.f32 %v185, %v223
    %s226 = scalar_lea.vmem [#allocation6], 32
    %v227 = vld [vmem:[%s226] sm:$0xff]
    %v228 = vld [vmem:[%s226 + $0x8] sm:$0xff]
    %v229 = vld [vmem:[%s226 + $0x10] sm:$0xff]
    %v230 = vld [vmem:[%s226 + $0x18] sm:$0xff]
    %v232 = vsel %vm149, %v224, 0
    %v235 = vsel %vm149, %v225, 0
    %237 = vmatpush.msra.mxu0 0.0
    %238 = vmatpush.msra.mxu0 0.0
    %239 = vmatpush.msra.mxu0 0.0
    %240 = vmatpush.msra.mxu0 0.0
    %241 = vmatpush.msra.mxu0 0.0
    %242 = vmatpush.msra.mxu0 0.0
    %243 = vmatpush.msra.mxu0 0.0
    %244 = vmatpush.msra.mxu0 0.0
    %245 = vmatpush.msra.mxu0 0.0
    %246 = vmatpush.msra.mxu0 0.0
    %247 = vmatpush.msra.mxu0 0.0
    %248 = vmatpush.msra.mxu0 0.0
    %249 = vmatpush.msra.mxu0 %v230
    %250 = vmatpush.msra.mxu0 %v229
    %251 = vmatpush.msra.mxu0 %v228
    %252 = vmatpush.msra.mxu0 %v227
    %253 = vmatmul.f32.gmra.mxu0 %v232
    %v254 = vpop.f32.mrf.mxu0
    %v255 = vadd.f32 0.0, %v254
    %256 = vmatmul.f32.gmra.mxu0 %v235
    %v257 = vpop.f32.mrf.mxu0
    %v258 = vadd.f32 0.0, %v257
    %259 = vdwg.mxu0
    %v262 = vrot.slane %v255, 6
    %v263 = vrot.slane %v258, 6
    %vm266 = vcmask 1041408
    %v267 = vsel %vm266, 0.0, %v262
    %v268 = vsel %vm266, 0.0, %v263
    %v269 = vadd.f32 %v224, %v267
    %v270 = vadd.f32 %v225, %v268
    %s271 = scalar_lea.vmem [#allocation6], 64
    %v272 = vld [vmem:[%s271] sm:$0xff]
    %v273 = vld [vmem:[%s271 + $0x8] sm:$0xff]
    %v274 = vld [vmem:[%s271 + $0x10] sm:$0xff]
    %v275 = vld [vmem:[%s271 + $0x18] sm:$0xff]
    %v277 = vsel %vm149, %v269, 0
    %v280 = vsel %vm149, %v270, 0
    %282 = vmatpush.msra.mxu0 0.0
    %283 = vmatpush.msra.mxu0 0.0
    %284 = vmatpush.msra.mxu0 0.0
    %285 = vmatpush.msra.mxu0 0.0
    %286 = vmatpush.msra.mxu0 0.0
    %287 = vmatpush.msra.mxu0 0.0
    %288 = vmatpush.msra.mxu0 0.0
    %289 = vmatpush.msra.mxu0 0.0
    %290 = vmatpush.msra.mxu0 0.0
    %291 = vmatpush.msra.mxu0 0.0
    %292 = vmatpush.msra.mxu0 0.0
    %293 = vmatpush.msra.mxu0 0.0
    %294 = vmatpush.msra.mxu0 %v275
    %295 = vmatpush.msra.mxu0 %v274
    %296 = vmatpush.msra.mxu0 %v273
    %297 = vmatpush.msra.mxu0 %v272
    %298 = vmatmul.f32.gmra.mxu0 %v277
    %v299 = vpop.f32.mrf.mxu0
    %v300 = vadd.f32 0.0, %v299
    %301 = vmatmul.f32.gmra.mxu0 %v280
    %v302 = vpop.f32.mrf.mxu0
    %v303 = vadd.f32 0.0, %v302
    %304 = vdwg.mxu0
    %v307 = vrot.slane %v300, 4
    %v308 = vrot.slane %v303, 4
    %vm311 = vcmask 1043456
    %v312 = vsel %vm311, 0.0, %v307
    %v313 = vsel %vm311, 0.0, %v308
    %v314 = vadd.f32 %v269, %v312
    %v315 = vadd.f32 %v270, %v313
    %v316 = vrot.slane %v144, 1
    %v320 = vrot.slane %v314, 7
    %v321 = vrot.slane %v315, 7
    %v324 = vsel %vm221, %v144, %v320
    %v325 = vsel %vm221, %v316, %v321
    %v326 = vld [vmem:[%s4] sm:$0xff]
    %v327 = vld [vmem:[%s4 + $0x8] sm:$0xff]
    %v328 = vld [vmem:[%s4 + $0x10] sm:$0xff]
    %v329 = vld [vmem:[%s4 + $0x18] sm:$0xff]
    %v331 = vsel %vm149, %v324, 0
    %v334 = vsel %vm149, %v325, 0
    %336 = vmatpush.msra.mxu0 0.0
    %337 = vmatpush.msra.mxu0 0.0
    %338 = vmatpush.msra.mxu0 0.0
    %339 = vmatpush.msra.mxu0 0.0
    %340 = vmatpush.msra.mxu0 0.0
    %341 = vmatpush.msra.mxu0 0.0
    %342 = vmatpush.msra.mxu0 0.0
    %343 = vmatpush.msra.mxu0 0.0
    %344 = vmatpush.msra.mxu0 0.0
    %345 = vmatpush.msra.mxu0 0.0
    %346 = vmatpush.msra.mxu0 0.0
    %347 = vmatpush.msra.mxu0 0.0
    %348 = vmatpush.msra.mxu0 %v329
    %349 = vmatpush.msra.mxu0 %v328
    %350 = vmatpush.msra.mxu0 %v327
    %351 = vmatpush.msra.mxu0 %v326
    %352 = vmatmul.f32.gmra.mxu0 %v331
    %v353 = vpop.f32.mrf.mxu0
    %v354 = vadd.f32 0.0, %v353
    %355 = vmatmul.f32.gmra.mxu0 %v334
    %v356 = vpop.f32.mrf.mxu0
    %v357 = vadd.f32 0.0, %v356
    %358 = vdwg.mxu0
    %v359 = vadd.f32 %v139, %v354
    %v360 = vadd.f32 %v142, %v357
    %361 = vst.msk [vmem:[#allocation8] sm:$0xff] %vm85, %v359
    %362 = vst.msk [vmem:[#allocation8 + $0x8] sm:$0xff] %vm85, %v360
    %vm364 = vcmask 261127
    %365 = vst.msk [vmem:[#allocation2 - $0x7] sm:$0x80] %vm364, %v314
    %vm366 = vcmask 253952
    %367 = vst.msk [vmem:[#allocation2 + $0x1] sm:$0x1] %vm366, %v321
    // Predicated region
    $region46: #{tpu_custom_call.1} parent=1 // pred_check
      _
    $region47: #{tpu_custom_call.1} parent=1 // pred_check_branch
      %369 = sbr.rel (0) target = $region49
    $region48: #{tpu_custom_call.1} parent=1 // pred_region
      %371 = vsyncadd [#allocation5], 0
      %s372 = sshll.u32 [#allocation8], 4
      %s373 = int_to_ptr.vmem [resolvable:$true] %s372
      %s374 = sshll.u32 %s8, 4
      %s375 = int_to_ptr.hbm [resolvable:$true] %s374
      %380 = dma.vmem_to_hbm [thread:$0]  %s373, 256, %s375, [#allocation5], 128, 128, 8
    $region49: #{tpu_custom_call.1} parent=1 // pred_fallthru
      _
    // Predicated region
    $region50: #{tpu_custom_call.1} parent=1 // pred_check
      _
    $region51: #{tpu_custom_call.1} parent=1 // pred_check_branch
      %382 = sbr.rel (0) target = $region53
    $region52: #{tpu_custom_call.1} parent=1 // pred_region
      %384 = dma.done [#allocation5], 256
    $region53: #{tpu_custom_call.1} parent=1 // pred_fallthru
      _
    %385 = vsyncpa [#allocation4], 1
    %386 = vsyncpa [#allocation7], 1
    %387 = vsyncpa [#allocation5], 1

</llo_original>
